<compile_context>
chip_gen: v5e
topology: v5e:2x2
jax: 0.10.0
libtpu: 0.0.40
codegen_flags: <defaults>
</compile_context>

<pallas_src>
import math
import jax
import jax.numpy as jnp
from jax.experimental import pallas as pl
from jax.experimental.pallas import tpu as pltpu

LANE = 128


def _rup(n, m):
    return ((n + m - 1) // m) * m


def _pad2d(a, rows, cols):
    r, c = a.shape
    return jnp.pad(a, ((0, rows - r), (0, cols - c)))


def _choose_tm(B, cap=1024, floor=256):
    """Batch tile rows (sweepable cap 512/1024/2048).

    Big enough to amortize the ~0.35us per-grid-step overhead, but capped so
    the grid keeps >=2 steps at larger batch sizes (v7x megacore sharding).
    """
    if B <= floor:
        return max(8, _rup(B, 8))
    return int(min(cap, max(floor, _rup(pl.cdiv(B, 8), 8))))


# ----------------------------- reference timestep embedding (f32) ------------
def timestep_embedding(timesteps, dim, max_period=10000):
    half = dim // 2
    freqs = jnp.exp(-math.log(max_period) * jnp.arange(half, dtype=jnp.float32) / half)
    args = timesteps[:, None].astype(jnp.float32) * freqs[None]
    emb = jnp.concatenate([jnp.cos(args), jnp.sin(args)], axis=-1)
    if dim % 2:
        emb = jnp.concatenate([emb, jnp.zeros_like(emb[:, :1])], axis=-1)
    return emb


# ----------------------------- Pallas kernel ---------------------------------
def make_dnn_kernel(n_in, n_out):
    """Kernel closed over the (static) number of in/out layers.

    Ref layout (weights bf16, biases/activations accumulated in f32):
      x_ref    : (TM, D)    f32   input rows (unpadded; Mosaic pads K internally)
      t_ref    : (TM, 1)    f32   timesteps
      freqs_ref: (1, 128)   f32   freqs duplicated on [0,half) and [half,2*half)
      phase_ref: (1, 128)   f32   +pi/2 on the cos lanes, 0 elsewhere
      w1x_ref  : (D, H1p)   bf16  first-layer weights acting on x
      wtrig_ref: (128, H1p) bf16  emb_layer folded into first layer, cos/sin rows
      b1_ref   : (1, H1p)   f32   folded bias (b1 + b_emb @ W1e)
      then (w_bf16, b_f32) pairs for remaining in_layers and all out_layers
      o_ref    : (TM, OUT)  output (unpadded lanes)
    """

    def kernel(x_ref, t_ref, freqs_ref, phase_ref, w1x_ref, wtrig_ref, b1_ref, *rest):
        in_wb = rest[: 2 * (n_in - 1)]
        out_wb = rest[2 * (n_in - 1): 2 * (n_in - 1) + 2 * n_out]
        o_ref = rest[-1]

        # Fused sinusoidal timestep embedding: single transcendental pass.
        # cos lanes use sin(arg + pi/2) == cos(arg); padded lanes give sin(0)=0
        # and also hit zero weight rows -> no spurious contribution.
        trig = jnp.sin(t_ref[...] * freqs_ref[...] + phase_ref[...]).astype(jnp.bfloat16)
        x = x_ref[...].astype(jnp.bfloat16)

        # dropout -> identity (eval mode), norm=False.
        # First in_layer on concat([x, emb_layer(temb)]) with emb_layer folded.
        acc = (jnp.dot(x, w1x_ref[...], preferred_element_type=jnp.float32)
               + jnp.dot(trig, wtrig_ref[...], preferred_element_type=jnp.float32)
               + b1_ref[...])
        h = jnp.tanh(acc.astype(jnp.bfloat16))        # bf16 EUP tanh

        # remaining in_layers: Linear + tanh
        for i in range(n_in - 1):
            w = in_wb[2 * i][...]
            b = in_wb[2 * i + 1][...]
            acc = jnp.dot(h, w, preferred_element_type=jnp.float32) + b
            h = jnp.tanh(acc.astype(jnp.bfloat16))

        # out_layers: Linear (+ tanh except last)
        for j in range(n_out):
            w = out_wb[2 * j][...]
            b = out_wb[2 * j + 1][...]
            acc = jnp.dot(h, w, preferred_element_type=jnp.float32) + b
            if j != n_out - 1:
                h = jnp.tanh(acc.astype(jnp.bfloat16))

        o_ref[...] = acc.astype(o_ref.dtype)

    return kernel


# ----------------------------- parameter init --------------------------------
def init_linear(key, fan_in, fan_out):
    """Matches DNN.init_weights: W ~ N(0, sqrt(2/(fan_in+fan_out))), b ~ N(0, 1e-3)."""
    kw, kb = jax.random.split(key)
    std = math.sqrt(2.0 / (fan_in + fan_out))
    w = jax.random.normal(kw, (fan_out, fan_in), jnp.float32) * std  # torch layout (out, in)
    b = jax.random.normal(kb, (fan_out,), jnp.float32) * 0.001
    return w.T, b.reshape(1, -1)  # kernel layout: (in, out), (1, out)


def init_params(key, in_dims, out_dims, emb_size):
    in_dims_temp = [in_dims[0] + emb_size] + list(in_dims[1:])
    keys = jax.random.split(key, 1 + (len(in_dims_temp) - 1) + (len(out_dims) - 1))
    ki = 0
    w_emb, b_emb = init_linear(keys[ki], emb_size, emb_size); ki += 1
    in_layers = []
    for d_in, d_out in zip(in_dims_temp[:-1], in_dims_temp[1:]):
        in_layers.append(init_linear(keys[ki], d_in, d_out)); ki += 1
    out_layers = []
    for d_in, d_out in zip(out_dims[:-1], out_dims[1:]):
        out_layers.append(init_linear(keys[ki], d_in, d_out)); ki += 1
    return dict(w_emb=w_emb, b_emb=b_emb, in_layers=in_layers, out_layers=out_layers)


# ----------------------------- wrapper ---------------------------------------
def dnn_forward(x, timesteps, params, in_dims, out_dims, emb_size,
                max_period=10000, out_dtype=jnp.float32):
    B, D = x.shape
    assert D == in_dims[0]

    w_emb, b_emb = params["w_emb"], params["b_emb"]
    in_layers = params["in_layers"]
    out_layers = params["out_layers"]
    n_in, n_out = len(in_layers), len(out_layers)
    out_dim = out_dims[-1]

    # ---- fold emb_layer into the first in_layer (exact linear algebra) ------
    w1, b1 = in_layers[0]                       # (D+emb, H1), (1, H1)
    w1x, w1e = w1[:D, :], w1[D:, :]
    w_fold = w_emb @ w1e                        # (emb, H1)
    b_fold = b1 + b_emb @ w1e                   # (1, H1)
    half = emb_size // 2
    w_cos = w_fold[:half, :]
    w_sin = w_fold[half:2 * half, :]            # odd trailing zero column drops out

    H1 = w1.shape[1]
    H1p = _rup(H1, LANE)
    TP = LANE                                   # trig operand lane width

    # trig operand layout: lanes [0,half) carry cos (via +pi/2 phase),
    # lanes [half, 2*half) carry sin, remaining lanes are exactly zero.
    freqs = jnp.exp(-math.log(max_period) * jnp.arange(half, dtype=jnp.float32) / half)
    freqs2 = (jnp.zeros((1, TP), jnp.float32)
              .at[0, :half].set(freqs)
              .at[0, half:2 * half].set(freqs))
    phase = jnp.zeros((1, TP), jnp.float32).at[0, :half].set(jnp.float32(math.pi / 2))

    bf = jnp.bfloat16
    w_trig = (jnp.zeros((TP, H1p), jnp.float32)
              .at[:half, :H1].set(w_cos)
              .at[half:2 * half, :H1].set(w_sin)).astype(bf)

    # ---- kernel args (weights/biases are tiny & resident; padding them is
    #      one-time param prep, not a per-call activation HBM pass) -----------
    args = [x.astype(jnp.float32),
            timesteps.astype(jnp.float32).reshape(-1, 1),
            freqs2, phase,
            _pad2d(w1x, D, H1p).astype(bf),
            w_trig,
            _pad2d(b_fold, 1, H1p)]
    for (w, b) in in_layers[1:]:
        kip, kop = _rup(w.shape[0], LANE), _rup(w.shape[1], LANE)
        args += [_pad2d(w, kip, kop).astype(bf), _pad2d(b, 1, kop)]
    for j, (w, b) in enumerate(out_layers):
        kip = _rup(w.shape[0], LANE)
        # final layer keeps its true out width -> kernel writes (B, out_dim)
        # directly, no lane padding + wrapper slice round trip.
        kop = w.shape[1] if j == n_out - 1 else _rup(w.shape[1], LANE)
        args += [_pad2d(w, kip, kop).astype(bf), _pad2d(b, 1, kop)]

    # ---- batch tiling (no batch padding; ragged last block handled) ---------
    TM = _choose_tm(B)
    grid = (pl.cdiv(B, TM),)

    # x / t / out tiled over the batch grid axis; weights, biases, freqs keep a
    # constant block index -> stay resident in VMEM (no re-DMA per grid step).
    in_specs = [
        pl.BlockSpec((TM, D), lambda i: (i, 0)),
        pl.BlockSpec((TM, 1), lambda i: (i, 0)),
    ]
    in_specs += [pl.BlockSpec(a.shape, lambda i: (0, 0)) for a in args[2:]]

    # TODO(synk): set out_dtype=jnp.bfloat16 if the consumer tolerates it to
    #             halve output writeback (accumulation stays f32 regardless).
    out = pl.pallas_call(
        make_dnn_kernel(n_in, n_out),
        out_shape=jax.ShapeDtypeStruct((B, out_dim), out_dtype),
        grid=grid,
        in_specs=in_specs,
        out_specs=pl.BlockSpec((TM, out_dim), lambda i: (i, 0)),
        compiler_params=pltpu.CompilerParams(dimension_semantics=("parallel",)),
    )(*args)

    return out


# ----------------------------- pure-JAX reference (unfused, f32) -------------
def dnn_reference(x, timesteps, params, in_dims, out_dims, emb_size):
    temb = timestep_embedding(timesteps, emb_size)
    emb = temb @ params["w_emb"] + params["b_emb"]
    h = jnp.concatenate([x, emb], axis=-1)
    for (w, b) in params["in_layers"]:
        h = jnp.tanh(h @ w + b)
    n_out = len(params["out_layers"])
    for j, (w, b) in enumerate(params["out_layers"]):
        h = h @ w + b
        if j != n_out - 1:
            h = jnp.tanh(h)
    return h


# ----------------------------- main -------------------------------------------
if __name__ == "__main__":
    # small shapes consistent with the module: latent item-vector diffusion MLP
    B = 8
    in_dims = [64, 48, 32]     # encoder dims
    out_dims = [32, 48, 64]    # decoder dims (out_dims[0] == in_dims[-1])
    emb_size = 16

    key = jax.random.PRNGKey(0)
    k_param, k_x, k_t = jax.random.split(key, 3)

    params = init_params(k_param, in_dims, out_dims, emb_size)
    x = jax.random.normal(k_x, (B, in_dims[0]), jnp.float32)
    timesteps = jax.random.randint(k_t, (B,), 0, 1000).astype(jnp.float32)

    out = dnn_forward(x, timesteps, params, in_dims, out_dims, emb_size)
    out = jax.block_until_ready(out)

    ref = dnn_reference(x, timesteps, params, in_dims, out_dims, emb_size)
    assert out.shape == (B, out_dims[-1])
    # bf16 matmul operands + bf16 tanh with f32 accumulation -> loose tolerance
    assert jnp.allclose(out, ref, atol=3e-2, rtol=3e-2), "mismatch vs JAX reference"

    print("KERNEL_OK")
</pallas_src>

<mosaic_0001>
module attributes {stable_mosaic.version = 11 : i64} {
  func.func @kernel(%arg0: i32, %arg1: memref<8x64xf32, #tpu.memory_space<vmem>>, %arg2: memref<8x1xf32, #tpu.memory_space<vmem>>, %arg3: memref<1x128xf32, #tpu.memory_space<vmem>>, %arg4: memref<1x128xf32, #tpu.memory_space<vmem>>, %arg5: memref<64x128xbf16, #tpu.memory_space<vmem>>, %arg6: memref<128x128xbf16, #tpu.memory_space<vmem>>, %arg7: memref<1x128xf32, #tpu.memory_space<vmem>>, %arg8: memref<128x128xbf16, #tpu.memory_space<vmem>>, %arg9: memref<1x128xf32, #tpu.memory_space<vmem>>, %arg10: memref<128x128xbf16, #tpu.memory_space<vmem>>, %arg11: memref<1x128xf32, #tpu.memory_space<vmem>>, %arg12: memref<128x64xbf16, #tpu.memory_space<vmem>>, %arg13: memref<1x64xf32, #tpu.memory_space<vmem>>, %arg14: memref<8x64xf32, #tpu.memory_space<vmem>>) attributes {dimension_semantics = [#tpu.dimension_semantics<parallel>], iteration_bounds = array<i64: 1>, scalar_prefetch = 0 : i64, scratch_operands = 0 : i64, tpu.core_type = #tpu.core_type<tc>, window_params = [{transform_indices = @transform_0, window_bounds = array<i64: 8, 64>}, {transform_indices = @transform_1, window_bounds = array<i64: 8, 1>}, {pipeline_mode = #tpu.pipeline_mode<synchronous>, transform_indices = @transform_2, window_bounds = array<i64: 1, 128>}, {pipeline_mode = #tpu.pipeline_mode<synchronous>, transform_indices = @transform_3, window_bounds = array<i64: 1, 128>}, {pipeline_mode = #tpu.pipeline_mode<synchronous>, transform_indices = @transform_4, window_bounds = array<i64: 64, 128>}, {pipeline_mode = #tpu.pipeline_mode<synchronous>, transform_indices = @transform_5, window_bounds = array<i64: 128, 128>}, {pipeline_mode = #tpu.pipeline_mode<synchronous>, transform_indices = @transform_6, window_bounds = array<i64: 1, 128>}, {pipeline_mode = #tpu.pipeline_mode<synchronous>, transform_indices = @transform_7, window_bounds = array<i64: 128, 128>}, {pipeline_mode = #tpu.pipeline_mode<synchronous>, transform_indices = @transform_8, window_bounds = array<i64: 1, 128>}, {pipeline_mode = #tpu.pipeline_mode<synchronous>, transform_indices = @transform_9, window_bounds = array<i64: 128, 128>}, {pipeline_mode = #tpu.pipeline_mode<synchronous>, transform_indices = @transform_10, window_bounds = array<i64: 1, 128>}, {pipeline_mode = #tpu.pipeline_mode<synchronous>, transform_indices = @transform_11, window_bounds = array<i64: 128, 64>}, {pipeline_mode = #tpu.pipeline_mode<synchronous>, transform_indices = @transform_12, window_bounds = array<i64: 1, 64>}, {transform_indices = @transform_13, window_bounds = array<i64: 8, 64>}]} {
    %c0 = arith.constant 0 : index
    %c0_0 = arith.constant 0 : index
    %0 = vector.load %arg2[%c0, %c0_0] : memref<8x1xf32, #tpu.memory_space<vmem>>, vector<8x1xf32>
    %c0_1 = arith.constant 0 : index
    %c0_2 = arith.constant 0 : index
    %1 = vector.load %arg3[%c0_1, %c0_2] : memref<1x128xf32, #tpu.memory_space<vmem>>, vector<1x128xf32>
    %2 = vector.broadcast %0 : vector<8x1xf32> to vector<8x128xf32>
    %3 = vector.broadcast %1 : vector<1x128xf32> to vector<8x128xf32>
    %4 = arith.mulf %2, %3 : vector<8x128xf32>
    %c0_3 = arith.constant 0 : index
    %c0_4 = arith.constant 0 : index
    %5 = vector.load %arg4[%c0_3, %c0_4] : memref<1x128xf32, #tpu.memory_space<vmem>>, vector<1x128xf32>
    %6 = vector.broadcast %5 : vector<1x128xf32> to vector<8x128xf32>
    %7 = arith.addf %4, %6 : vector<8x128xf32>
    %8 = math.sin %7 : vector<8x128xf32>
    %9 = arith.truncf %8 : vector<8x128xf32> to vector<8x128xbf16>
    %c0_5 = arith.constant 0 : index
    %c0_6 = arith.constant 0 : index
    %10 = vector.load %arg1[%c0_5, %c0_6] : memref<8x64xf32, #tpu.memory_space<vmem>>, vector<8x64xf32>
    %11 = arith.truncf %10 : vector<8x64xf32> to vector<8x64xbf16>
    %c0_7 = arith.constant 0 : index
    %c0_8 = arith.constant 0 : index
    %12 = vector.load %arg5[%c0_7, %c0_8] : memref<64x128xbf16, #tpu.memory_space<vmem>>, vector<64x128xbf16>
    %cst = arith.constant dense<0.000000e+00> : vector<8x128xf32>
    %13 = tpu.matmul %11, %12, %cst {dimension_numbers = #tpu.dot_dimension_numbers<[1], [0], [0], [1], [0, 0, 1, 1], [], []>} : vector<8x64xbf16>, vector<64x128xbf16>, vector<8x128xf32> -> vector<8x128xf32>
    %c0_9 = arith.constant 0 : index
    %c0_10 = arith.constant 0 : index
    %14 = vector.load %arg6[%c0_9, %c0_10] : memref<128x128xbf16, #tpu.memory_space<vmem>>, vector<128x128xbf16>
    %cst_11 = arith.constant dense<0.000000e+00> : vector<8x128xf32>
    %15 = tpu.matmul %9, %14, %cst_11 {dimension_numbers = #tpu.dot_dimension_numbers<[1], [0], [0], [1], [0, 0, 1, 1], [], []>} : vector<8x128xbf16>, vector<128x128xbf16>, vector<8x128xf32> -> vector<8x128xf32>
    %16 = arith.addf %13, %15 : vector<8x128xf32>
    %c0_12 = arith.constant 0 : index
    %c0_13 = arith.constant 0 : index
    %17 = vector.load %arg7[%c0_12, %c0_13] : memref<1x128xf32, #tpu.memory_space<vmem>>, vector<1x128xf32>
    %18 = vector.broadcast %17 : vector<1x128xf32> to vector<8x128xf32>
    %19 = arith.addf %16, %18 : vector<8x128xf32>
    %20 = arith.truncf %19 : vector<8x128xf32> to vector<8x128xbf16>
    %21 = math.tanh %20 : vector<8x128xbf16>
    %c0_14 = arith.constant 0 : index
    %c0_15 = arith.constant 0 : index
    %22 = vector.load %arg8[%c0_14, %c0_15] : memref<128x128xbf16, #tpu.memory_space<vmem>>, vector<128x128xbf16>
    %c0_16 = arith.constant 0 : index
    %c0_17 = arith.constant 0 : index
    %23 = vector.load %arg9[%c0_16, %c0_17] : memref<1x128xf32, #tpu.memory_space<vmem>>, vector<1x128xf32>
    %cst_18 = arith.constant dense<0.000000e+00> : vector<8x128xf32>
    %24 = tpu.matmul %21, %22, %cst_18 {dimension_numbers = #tpu.dot_dimension_numbers<[1], [0], [0], [1], [0, 0, 1, 1], [], []>} : vector<8x128xbf16>, vector<128x128xbf16>, vector<8x128xf32> -> vector<8x128xf32>
    %25 = vector.broadcast %23 : vector<1x128xf32> to vector<8x128xf32>
    %26 = arith.addf %24, %25 : vector<8x128xf32>
    %27 = arith.truncf %26 : vector<8x128xf32> to vector<8x128xbf16>
    %28 = math.tanh %27 : vector<8x128xbf16>
    %c0_19 = arith.constant 0 : index
    %c0_20 = arith.constant 0 : index
    %29 = vector.load %arg10[%c0_19, %c0_20] : memref<128x128xbf16, #tpu.memory_space<vmem>>, vector<128x128xbf16>
    %c0_21 = arith.constant 0 : index
    %c0_22 = arith.constant 0 : index
    %30 = vector.load %arg11[%c0_21, %c0_22] : memref<1x128xf32, #tpu.memory_space<vmem>>, vector<1x128xf32>
    %cst_23 = arith.constant dense<0.000000e+00> : vector<8x128xf32>
    %31 = tpu.matmul %28, %29, %cst_23 {dimension_numbers = #tpu.dot_dimension_numbers<[1], [0], [0], [1], [0, 0, 1, 1], [], []>} : vector<8x128xbf16>, vector<128x128xbf16>, vector<8x128xf32> -> vector<8x128xf32>
    %32 = vector.broadcast %30 : vector<1x128xf32> to vector<8x128xf32>
    %33 = arith.addf %31, %32 : vector<8x128xf32>
    %34 = arith.truncf %33 : vector<8x128xf32> to vector<8x128xbf16>
    %35 = math.tanh %34 : vector<8x128xbf16>
    %c0_24 = arith.constant 0 : index
    %c0_25 = arith.constant 0 : index
    %36 = vector.load %arg12[%c0_24, %c0_25] : memref<128x64xbf16, #tpu.memory_space<vmem>>, vector<128x64xbf16>
    %c0_26 = arith.constant 0 : index
    %c0_27 = arith.constant 0 : index
    %37 = vector.load %arg13[%c0_26, %c0_27] : memref<1x64xf32, #tpu.memory_space<vmem>>, vector<1x64xf32>
    %cst_28 = arith.constant dense<0.000000e+00> : vector<8x64xf32>
    %38 = tpu.matmul %35, %36, %cst_28 {dimension_numbers = #tpu.dot_dimension_numbers<[1], [0], [0], [1], [0, 0, 1, 1], [], []>} : vector<8x128xbf16>, vector<128x64xbf16>, vector<8x64xf32> -> vector<8x64xf32>
    %39 = vector.broadcast %37 : vector<1x64xf32> to vector<8x64xf32>
    %40 = arith.addf %38, %39 : vector<8x64xf32>
    %c0_29 = arith.constant 0 : index
    %c0_30 = arith.constant 0 : index
    %41 = vector.load %arg14[%c0_29, %c0_30] : memref<8x64xf32, #tpu.memory_space<vmem>>, vector<8x64xf32>
    tpu.vector_store %arg14[%c0_29, %c0_30], %40 {strides = array<i32>} : memref<8x64xf32, #tpu.memory_space<vmem>>, vector<8x64xf32>,
    return
  }
  func.func @transform_0(%arg0: i32) -> (i32, i32) {
    %c0_i32 = arith.constant 0 : i32
    %c0_i32_0 = arith.constant 0 : i32
    return %arg0, %c0_i32 : i32, i32
  }
  func.func @transform_1(%arg0: i32) -> (i32, i32) {
    %c0_i32 = arith.constant 0 : i32
    %c0_i32_0 = arith.constant 0 : i32
    return %arg0, %c0_i32 : i32, i32
  }
  func.func @transform_2(%arg0: i32) -> (i32, i32) {
    %c0_i32 = arith.constant 0 : i32
    %c0_i32_0 = arith.constant 0 : i32
    %c0_i32_1 = arith.constant 0 : i32
    return %c0_i32, %c0_i32_0 : i32, i32
  }
  func.func @transform_3(%arg0: i32) -> (i32, i32) {
    %c0_i32 = arith.constant 0 : i32
    %c0_i32_0 = arith.constant 0 : i32
    %c0_i32_1 = arith.constant 0 : i32
    return %c0_i32, %c0_i32_0 : i32, i32
  }
  func.func @transform_4(%arg0: i32) -> (i32, i32) {
    %c0_i32 = arith.constant 0 : i32
    %c0_i32_0 = arith.constant 0 : i32
    %c0_i32_1 = arith.constant 0 : i32
    return %c0_i32, %c0_i32_0 : i32, i32
  }
  func.func @transform_5(%arg0: i32) -> (i32, i32) {
    %c0_i32 = arith.constant 0 : i32
    %c0_i32_0 = arith.constant 0 : i32
    %c0_i32_1 = arith.constant 0 : i32
    return %c0_i32, %c0_i32_0 : i32, i32
  }
  func.func @transform_6(%arg0: i32) -> (i32, i32) {
    %c0_i32 = arith.constant 0 : i32
    %c0_i32_0 = arith.constant 0 : i32
    %c0_i32_1 = arith.constant 0 : i32
    return %c0_i32, %c0_i32_0 : i32, i32
  }
  func.func @transform_7(%arg0: i32) -> (i32, i32) {
    %c0_i32 = arith.constant 0 : i32
    %c0_i32_0 = arith.constant 0 : i32
    %c0_i32_1 = arith.constant 0 : i32
    return %c0_i32, %c0_i32_0 : i32, i32
  }
  func.func @transform_8(%arg0: i32) -> (i32, i32) {
    %c0_i32 = arith.constant 0 : i32
    %c0_i32_0 = arith.constant 0 : i32
    %c0_i32_1 = arith.constant 0 : i32
    return %c0_i32, %c0_i32_0 : i32, i32
  }
  func.func @transform_9(%arg0: i32) -> (i32, i32) {
    %c0_i32 = arith.constant 0 : i32
    %c0_i32_0 = arith.constant 0 : i32
    %c0_i32_1 = arith.constant 0 : i32
    return %c0_i32, %c0_i32_0 : i32, i32
  }
  func.func @transform_10(%arg0: i32) -> (i32, i32) {
    %c0_i32 = arith.constant 0 : i32
    %c0_i32_0 = arith.constant 0 : i32
    %c0_i32_1 = arith.constant 0 : i32
    return %c0_i32, %c0_i32_0 : i32, i32
  }
  func.func @transform_11(%arg0: i32) -> (i32, i32) {
    %c0_i32 = arith.constant 0 : i32
    %c0_i32_0 = arith.constant 0 : i32
    %c0_i32_1 = arith.constant 0 : i32
    return %c0_i32, %c0_i32_0 : i32, i32
  }
  func.func @transform_12(%arg0: i32) -> (i32, i32) {
    %c0_i32 = arith.constant 0 : i32
    %c0_i32_0 = arith.constant 0 : i32
    %c0_i32_1 = arith.constant 0 : i32
    return %c0_i32, %c0_i32_0 : i32, i32
  }
  func.func @transform_13(%arg0: i32) -> (i32, i32) {
    %c0_i32 = arith.constant 0 : i32
    %c0_i32_0 = arith.constant 0 : i32
    return %arg0, %c0_i32 : i32, i32
  }
}

</mosaic_0001>

<llo_original>
// kernel: tpu_custom_call.1
$region0: #{tpu_custom_call.1}
  #allocation0 [shape = 'u32[]', space=smem, size = 0x4, offset = 0x4, fixed_abs, tag = 'smem constant byte address 0x4 - core index']
  #allocation1 [shape = 'u32[72,128]{1,0:T(1,128)}', space=vmem, size = 0x9000, scoped, tag = 'internal scratch']
  %s0 = inlined_call_operand.vmem [shape: f32[8,64], index: 0, kind: input, shape index: {}]
  %s1 = inlined_call_operand.vmem [shape: f32[8,1], index: 1, kind: input, shape index: {}]
  %s2 = inlined_call_operand.vmem [shape: f32[1,128], index: 2, kind: input, shape index: {}]
  %s3 = inlined_call_operand.vmem [shape: f32[1,128], index: 3, kind: input, shape index: {}]
  %s4 = inlined_call_operand.vmem [shape: bf16[64,128], index: 4, kind: input, shape index: {}]
  %s5 = inlined_call_operand.vmem [shape: bf16[128,128], index: 5, kind: input, shape index: {}]
  %s6 = inlined_call_operand.vmem [shape: f32[1,128], index: 6, kind: input, shape index: {}]
  %s7 = inlined_call_operand.hbm [shape: bf16[128,128], index: 7, kind: input, shape index: {}]
  %s8 = inlined_call_operand.vmem [shape: f32[1,128], index: 8, kind: input, shape index: {}]
  %s9 = inlined_call_operand.hbm [shape: bf16[128,128], index: 9, kind: input, shape index: {}]
  %s10 = inlined_call_operand.vmem [shape: f32[1,128], index: 10, kind: input, shape index: {}]
  %s11 = inlined_call_operand.vmem [shape: bf16[128,64], index: 11, kind: input, shape index: {}]
  %s12 = inlined_call_operand.vmem [shape: f32[1,64], index: 12, kind: input, shape index: {}]
  %s13 = inlined_call_operand.hbm [shape: f32[8,64], index: 13, kind: output, shape index: {}]
  %s14 = sld [smem:[#allocation0]]
  $region70: #{tpu_custom_call.1} parent=0
    _
  %s16 = ssub.s32 1, %s14
  %s17 = scalar_select 0, %s16, %s14
  $region1: #{tpu_custom_call.1} parent=0
    #allocation2 [shape = 'u8[32768]{0}', space=vmem, size = 0x8000, scoped, tag = 'input window, operand 7, single buffered']
    #allocation3 [shape = 's32[1]{0}', space=sflag, size = 0x4, scoped, tag = 'scoped memory for tpu_custom_call.1']
    #allocation4 [shape = 's32[1]{0}', space=sflag, size = 0x4, scoped, tag = 'scoped memory for tpu_custom_call.1']
    #allocation5 [shape = 'u8[32768]{0}', space=vmem, size = 0x8000, scoped, tag = 'input window, operand 9, single buffered']
    #allocation6 [shape = 's32[1]{0}', space=sflag, size = 0x4, scoped, tag = 'scoped memory for tpu_custom_call.1']
    #allocation7 [shape = 'u8[4096]{0}', space=vmem, size = 0x1000, scoped, tag = 'output window, operand 0, single buffered']
    %18 = vsyncpa [#allocation3], 0
    %19 = vsyncpa [#allocation6], 0
    %20 = vsyncpa [#allocation4], 0
    // Predicated region
    $region2: #{tpu_custom_call.1} parent=1 // pred_check
      _
    $region3: #{tpu_custom_call.1} parent=1 // pred_check_branch
      %22 = sbr.rel (0) target = $region5
    $region4: #{tpu_custom_call.1} parent=1 // pred_region
      _
    $region5: #{tpu_custom_call.1} parent=1 // pred_fallthru
      _
    // Predicated region
    $region6: #{tpu_custom_call.1} parent=1 // pred_check
      _
    $region7: #{tpu_custom_call.1} parent=1 // pred_check_branch
      %24 = sbr.rel (0) target = $region9
    $region8: #{tpu_custom_call.1} parent=1 // pred_region
      _
    $region9: #{tpu_custom_call.1} parent=1 // pred_fallthru
      _
    // Predicated region
    $region10: #{tpu_custom_call.1} parent=1 // pred_check
      _
    $region11: #{tpu_custom_call.1} parent=1 // pred_check_branch
      %26 = sbr.rel (0) target = $region13
    $region12: #{tpu_custom_call.1} parent=1 // pred_region
      _
    $region13: #{tpu_custom_call.1} parent=1 // pred_fallthru
      _
    // Predicated region
    $region14: #{tpu_custom_call.1} parent=1 // pred_check
      _
    $region15: #{tpu_custom_call.1} parent=1 // pred_check_branch
      %28 = sbr.rel (0) target = $region17
    $region16: #{tpu_custom_call.1} parent=1 // pred_region
      _
    $region17: #{tpu_custom_call.1} parent=1 // pred_fallthru
      _
    // Predicated region
    $region18: #{tpu_custom_call.1} parent=1 // pred_check
      _
    $region19: #{tpu_custom_call.1} parent=1 // pred_check_branch
      %30 = sbr.rel (0) target = $region21
    $region20: #{tpu_custom_call.1} parent=1 // pred_region
      _
    $region21: #{tpu_custom_call.1} parent=1 // pred_fallthru
      _
    // Predicated region
    $region22: #{tpu_custom_call.1} parent=1 // pred_check
      _
    $region23: #{tpu_custom_call.1} parent=1 // pred_check_branch
      %32 = sbr.rel (0) target = $region25
    $region24: #{tpu_custom_call.1} parent=1 // pred_region
      _
    $region25: #{tpu_custom_call.1} parent=1 // pred_fallthru
      _
    // Predicated region
    $region26: #{tpu_custom_call.1} parent=1 // pred_check
      _
    $region27: #{tpu_custom_call.1} parent=1 // pred_check_branch
      %34 = sbr.rel (0) target = $region29
    $region28: #{tpu_custom_call.1} parent=1 // pred_region
      _
    $region29: #{tpu_custom_call.1} parent=1 // pred_fallthru
      _
    // Predicated region
    $region30: #{tpu_custom_call.1} parent=1 // pred_check
      _
    $region31: #{tpu_custom_call.1} parent=1 // pred_check_branch
      %36 = sbr.rel (0) target = $region33
    $region32: #{tpu_custom_call.1} parent=1 // pred_region
      %38 = vsyncadd [#allocation3], 0
      %s39 = sshll.u32 %s7, 4
      %s40 = int_to_ptr.hbm [resolvable:$true] %s39
      %s41 = sshll.u32 [#allocation2], 4
      %s42 = int_to_ptr.vmem [resolvable:$true] %s41
      %47 = dma.hbm_to_vmem [thread:$0]  %s40, 1024, %s42, [#allocation3], 64, 64, 4
    $region33: #{tpu_custom_call.1} parent=1 // pred_fallthru
      _
    // Predicated region
    $region34: #{tpu_custom_call.1} parent=1 // pred_check
      _
    $region35: #{tpu_custom_call.1} parent=1 // pred_check_branch
      %49 = sbr.rel (0) target = $region37
    $region36: #{tpu_custom_call.1} parent=1 // pred_region
      _
    $region37: #{tpu_custom_call.1} parent=1 // pred_fallthru
      _
    // Predicated region
    $region38: #{tpu_custom_call.1} parent=1 // pred_check
      _
    $region39: #{tpu_custom_call.1} parent=1 // pred_check_branch
      %51 = sbr.rel (0) target = $region41
    $region40: #{tpu_custom_call.1} parent=1 // pred_region
      %53 = vsyncadd [#allocation6], 0
      %s54 = sshll.u32 %s9, 4
      %s55 = int_to_ptr.hbm [resolvable:$true] %s54
      %s56 = sshll.u32 [#allocation5], 4
      %s57 = int_to_ptr.vmem [resolvable:$true] %s56
      %62 = dma.hbm_to_vmem [thread:$0]  %s55, 1024, %s57, [#allocation6], 64, 64, 4
    $region41: #{tpu_custom_call.1} parent=1 // pred_fallthru
      _
    // Predicated region
    $region42: #{tpu_custom_call.1} parent=1 // pred_check
      _
    $region43: #{tpu_custom_call.1} parent=1 // pred_check_branch
      %64 = sbr.rel (0) target = $region45
    $region44: #{tpu_custom_call.1} parent=1 // pred_region
      _
    $region45: #{tpu_custom_call.1} parent=1 // pred_fallthru
      _
    // Predicated region
    $region46: #{tpu_custom_call.1} parent=1 // pred_check
      _
    $region47: #{tpu_custom_call.1} parent=1 // pred_check_branch
      %66 = sbr.rel (0) target = $region49
    $region48: #{tpu_custom_call.1} parent=1 // pred_region
      _
    $region49: #{tpu_custom_call.1} parent=1 // pred_fallthru
      _
    // Predicated region
    $region50: #{tpu_custom_call.1} parent=1 // pred_check
      _
    $region51: #{tpu_custom_call.1} parent=1 // pred_check_branch
      %68 = sbr.rel (0) target = $region53
    $region52: #{tpu_custom_call.1} parent=1 // pred_region
      _
    $region53: #{tpu_custom_call.1} parent=1 // pred_fallthru
      _
    // Predicated region
    $region54: #{tpu_custom_call.1} parent=1 // pred_check
      _
    $region55: #{tpu_custom_call.1} parent=1 // pred_check_branch
      %70 = sbr.rel (0) target = $region57
    $region56: #{tpu_custom_call.1} parent=1 // pred_region
      %72 = dma.done [#allocation3], 1024
    $region57: #{tpu_custom_call.1} parent=1 // pred_fallthru
      _
    // Predicated region
    $region58: #{tpu_custom_call.1} parent=1 // pred_check
      _
    $region59: #{tpu_custom_call.1} parent=1 // pred_check_branch
      %74 = sbr.rel (0) target = $region61
    $region60: #{tpu_custom_call.1} parent=1 // pred_region
      %76 = dma.done [#allocation6], 1024
    $region61: #{tpu_custom_call.1} parent=1 // pred_fallthru
      _
    %v78 = vld [vmem:[%s1] sm:$0xff]
    %v79 = vld [vmem:[%s2] sm:$0x1]
    %81 = vset.pattern.permute.xlu0 0
    %82 = vperm.xlu0 %81, %v78
    %v83 = vpop.permute.xlu0 %82
    %v86 = vperm.slane %v79, 0
    %v88 = vmul.f32 %v83, %v86
    %v89 = vld [vmem:[%s3] sm:$0x1]
    %v91 = vperm.slane %v89, 0
    %v93 = vadd.f32 %v88, %v91
    %v94 = vand.u32 2147483647, %v93
    %vm95 = vcmp.le.f32.partialorder %v94, 0.7853982
    %vm96 = vcmp.lt.s32.totalorder %v93, 0
    %v97 = vand.u32 %v93, 2139095040
    %v98 = vshrl.u32 %v97, 23
    %v99 = vsub.s32 %v98, 127
    %v100 = vand.u32 2147483647, %v93
    %v101 = vand.u32 %v100, 8388607
    %v102 = vor.u32 %v101, 8388608
    %v103 = vsub.s32 0, %v102
    %v104 = vadd.s32 %v99, 1
    %vm105 = vcmp.gt.s32.totalorder %v104, 0
    %v106 = vsel %vm105, %v104, 0
    %v107 = vshrl.u32 %v106, 5
    %v108 = vand.u32 %v106, 31
    %v109 = vsub.s32 32, %v108
    %v110 = vshrl.u32 683565275, %v109
    %v111 = vshll.u32 683565275, %v108
    %v112 = vshrl.u32 2475754826, %v109
    %v113 = vor.u32 %v111, %v112
    %v114 = vshll.u32 2475754826, %v108
    %v115 = vshrl.u32 2131351028, %v109
    %v116 = vor.u32 %v114, %v115
    %v117 = vshll.u32 2131351028, %v108
    %v118 = vshrl.u32 2102212464, %v109
    %v119 = vor.u32 %v117, %v118
    %v120 = vshll.u32 2102212464, %v108
    %v121 = vshrl.u32 920167782, %v109
    %v122 = vor.u32 %v120, %v121
    %v123 = vshll.u32 920167782, %v108
    %v124 = vshrl.u32 1326507024, %v109
    %v125 = vor.u32 %v123, %v124
    %vm126 = vcmp.lt.s32.totalorder %v107, 1
    %vm127 = vcmp.lt.s32.totalorder %v107, 2
    %vm128 = vcmp.lt.s32.totalorder %v107, 3
    %vm129 = vcmp.lt.s32.totalorder %v107, 4
    %v130 = vsel %vm126, %v110, %v113
    %v131 = vsel %vm129, %v119, 2102212464
    %v132 = vsel %vm128, %v116, %v131
    %v133 = vsel %vm127, %v130, %v132
    %v134 = vsel %vm126, %v113, %v116
    %v135 = vsel %vm129, %v122, 920167782
    %v136 = vsel %vm128, %v119, %v135
    %v137 = vsel %vm127, %v134, %v136
    %v138 = vsel %vm126, %v116, %v119
    %v139 = vsel %vm129, %v125, 1326507024
    %v140 = vsel %vm128, %v122, %v139
    %v141 = vsel %vm127, %v138, %v140
    %v142 = vshll.u32 %v102, 8
    %v143 = vand.u32 %v142, 65535
    %v144 = vshrl.u32 %v142, 16
    %v145 = vand.u32 %v141, 65535
    %v146 = vshrl.u32 %v141, 16
    %v147 = vmul.u32 %v143, %v145
    %v148 = vmul.u32 %v143, %v146
    %v149 = vmul.u32 %v144, %v145
    %v150 = vmul.u32 %v144, %v146
    %v151 = vshll.u32 %v148, 16
    %v152 = vshrl.u32 %v148, 16
    %v153 = vshll.u32 %v149, 16
    %v154 = vshrl.u32 %v149, 16
    %vm155 = vc.u32 %v147, %v151
    %v156 = vsel %vm155, 1, 0
    %v157 = vadd.s32 %v147, %v151
    %v158 = vadd.s32 %v150, %v156
    %vm159 = vc.u32 %v157, %v153
    %v160 = vsel %vm159, 1, 0
    %v161 = vadd.s32 %v157, %v153
    %v162 = vadd.s32 %v158, %v160
    %v163 = vadd.s32 %v162, %v152
    %v164 = vadd.s32 %v163, %v154
    %v165 = vand.u32 %v142, 65535
    %v166 = vshrl.u32 %v142, 16
    %v167 = vand.u32 %v137, 65535
    %v168 = vshrl.u32 %v137, 16
    %v169 = vmul.u32 %v165, %v167
    %v170 = vmul.u32 %v165, %v168
    %v171 = vmul.u32 %v166, %v167
    %v172 = vmul.u32 %v166, %v168
    %v173 = vshll.u32 %v170, 16
    %v174 = vshrl.u32 %v170, 16
    %v175 = vshll.u32 %v171, 16
    %v176 = vshrl.u32 %v171, 16
    %vm177 = vc.u32 %v169, %v173
    %v178 = vsel %vm177, 1, 0
    %v179 = vadd.s32 %v169, %v173
    %v180 = vadd.s32 %v172, %v178
    %vm181 = vc.u32 %v179, %v175
    %v182 = vsel %vm181, 1, 0
    %v183 = vadd.s32 %v179, %v175
    %v184 = vadd.s32 %v180, %v182
    %v185 = vadd.s32 %v184, %v174
    %v186 = vadd.s32 %v185, %v176
    %v187 = vmul.u32 %v142, %v133
    %v188 = vadd.s32 %v164, %v183
    %vm189 = vc.u32 %v164, %v183
    %v190 = vadd.s32 %v186, 1
    %v191 = vsel %vm189, %v190, %v186
    %v192 = vadd.s32 %v187, %v191
    %v193 = vadd.s32 %v192, 536870912
    %v194 = vshrl.u32 %v193, 30
    %v195 = vshll.u32 %v194, 30
    %v196 = vsub.s32 %v192, %v195
    %vm197 = vcmp.lt.s32.totalorder %v196, 0
    %v198 = vsub.s32 0, %v196
    %v199 = vsel %vm197, %v198, %v196
    %v200 = vclz %v199
    %v201 = vsub.s32 %v200, 2
    %vm202 = vcmp.gt.s32.totalorder 0, %v201
    %v203 = vsel %vm202, 0, %v201
    %v204 = vsub.s32 32, %v203
    %v205 = vshll.u32 %v196, %v203
    %v206 = vshrl.u32 %v188, %v204
    %v207 = vor.u32 %v205, %v206
    %v208 = vsub.s32 4294967266, %v203
    %v209 = vadd.s32 %v208, 127
    %v210 = vshll.u32 %v209, 23
    %v211 = vor.u32 4788187, %v210
    %v212 = vand.u32 2147483647, %v211
    %v214 = vcvt.s32.f32 %v207
    %v215 = vmul.f32 %v214, %v212
    %v216 = vxor.u32 %v215, 2147483648
    %v217 = vsel %vm96, %v216, %v215
    %v218 = vsub.s32 4, %v194
    %v219 = vsel %vm96, %v218, %v194
    %v220 = vsel %vm95, %v93, %v217
    %v221 = vsel %vm95, 0, %v219
    %v222 = vmul.f32 %v220, %v220
    %v223 = vmul.f32 %v222, -0.001358992
    %v224 = vadd.f32 %v223, 0.041655596
    %v225 = vmul.f32 %v222, %v224
    %v226 = vadd.f32 %v225, -0.4999988
    %v227 = vmul.f32 %v222, %v226
    %v228 = vadd.f32 1.0, %v227
    %v229 = vmul.f32 %v220, %v220
    %v230 = vmul.f32 %v229, -0.00019511016
    %v231 = vadd.f32 %v230, 0.008332121
    %v232 = vmul.f32 %v229, %v231
    %v233 = vadd.f32 %v232, -0.16666654
    %v234 = vmul.f32 %v229, %v233
    %v235 = vadd.f32 %v234, 1.0
    %v236 = vmul.f32 %v235, %v220
    %vm237 = vweird.f32 %v93
    %v238 = vadd.s32 %v221, 3
    %v239 = vand.u32 %v238, 3
    %vm240 = vcmp.lt.s32.totalorder %v239, 2
    %vm241 = vcmp.eq.s32.totalorder %v239, 0
    %v242 = vxor.u32 %v236, 2147483648
    %v243 = vsel %vm241, %v228, %v242
    %vm244 = vcmp.eq.s32.totalorder %v239, 2
    %v245 = vxor.u32 %v228, 2147483648
    %v246 = vsel %vm244, %v245, %v236
    %v247 = vsel %vm240, %v243, %v246
    %v248 = vsel %vm237, nan, %v247
    %v249 = vpack.c.bf16 %v248, %v248
    %v250 = vld [vmem:[%s0] sm:$0xff]
    %v251 = vpack.c.bf16 %v250, %v250
    %v252 = vld [vmem:[%s4] sm:$0xf]
    %v253 = vld [vmem:[%s4 + $0x4] sm:$0xf]
    %v254 = vld [vmem:[%s4 + $0x8] sm:$0xf]
    %v255 = vld [vmem:[%s4 + $0xc] sm:$0xf]
    %v256 = vld [vmem:[%s4 + $0x10] sm:$0xf]
    %v257 = vld [vmem:[%s4 + $0x14] sm:$0xf]
    %v258 = vld [vmem:[%s4 + $0x18] sm:$0xf]
    %v259 = vld [vmem:[%s4 + $0x1c] sm:$0xf]
    %v260 = vld [vmem:[%s5] sm:$0xf]
    %v261 = vld [vmem:[%s5 + $0x4] sm:$0xf]
    %v262 = vld [vmem:[%s5 + $0x8] sm:$0xf]
    %v263 = vld [vmem:[%s5 + $0xc] sm:$0xf]
    %v264 = vld [vmem:[%s5 + $0x10] sm:$0xf]
    %v265 = vld [vmem:[%s5 + $0x14] sm:$0xf]
    %v266 = vld [vmem:[%s5 + $0x18] sm:$0xf]
    %v267 = vld [vmem:[%s5 + $0x1c] sm:$0xf]
    %v268 = vld [vmem:[%s5 + $0x20] sm:$0xf]
    %v269 = vld [vmem:[%s5 + $0x24] sm:$0xf]
    %v270 = vld [vmem:[%s5 + $0x28] sm:$0xf]
    %v271 = vld [vmem:[%s5 + $0x2c] sm:$0xf]
    %v272 = vld [vmem:[%s5 + $0x30] sm:$0xf]
    %v273 = vld [vmem:[%s5 + $0x34] sm:$0xf]
    %v274 = vld [vmem:[%s5 + $0x38] sm:$0xf]
    %v275 = vld [vmem:[%s5 + $0x3c] sm:$0xf]
    %v292 = vunpack.c.l.b16 %v260
    %v293 = vunpack.c.l.b16 %v261
    %v294 = vunpack.c.l.b16 %v262
    %v295 = vunpack.c.l.b16 %v263
    %v296 = vunpack.c.l.b16 %v264
    %v297 = vunpack.c.l.b16 %v265
    %v298 = vunpack.c.l.b16 %v266
    %v299 = vunpack.c.l.b16 %v267
    %v300 = vunpack.c.l.b16 %v268
    %v301 = vunpack.c.l.b16 %v269
    %v302 = vunpack.c.l.b16 %v270
    %v303 = vunpack.c.l.b16 %v271
    %v304 = vunpack.c.l.b16 %v272
    %v305 = vunpack.c.l.b16 %v273
    %v306 = vunpack.c.l.b16 %v274
    %v307 = vunpack.c.l.b16 %v275
    %v308 = vpack.c.b16 %v293, %v292
    %v309 = vpack.c.b16 %v295, %v294
    %v310 = vpack.c.b16 %v297, %v296
    %v311 = vpack.c.b16 %v299, %v298
    %v312 = vpack.c.b16 %v301, %v300
    %v313 = vpack.c.b16 %v303, %v302
    %v314 = vpack.c.b16 %v305, %v304
    %v315 = vpack.c.b16 %v307, %v306
    %324 = vmatpush.bf16.msra.mxu0 %v315
    %325 = vmatpush.bf16.msra.mxu0 %v314
    %326 = vmatpush.bf16.msra.mxu0 %v313
    %327 = vmatpush.bf16.msra.mxu0 %v312
    %328 = vmatpush.bf16.msra.mxu0 %v311
    %329 = vmatpush.bf16.msra.mxu0 %v310
    %330 = vmatpush.bf16.msra.mxu0 %v309
    %331 = vmatpush.bf16.msra.mxu0 %v308
    %332 = vmatmul.bf16.gmra.mxu0 %v249
    %v333 = vpop.f32.mrf.mxu0
    %v334 = vadd.f32 0.0, %v333
    %v335 = vpop.f32.mrf.mxu0
    %336 = vdwg.mxu0
    %v345 = vunpack.c.l.b16 %v252
    %v346 = vunpack.c.l.b16 %v253
    %v347 = vunpack.c.l.b16 %v254
    %v348 = vunpack.c.l.b16 %v255
    %v349 = vunpack.c.l.b16 %v256
    %v350 = vunpack.c.l.b16 %v257
    %v351 = vunpack.c.l.b16 %v258
    %v352 = vunpack.c.l.b16 %v259
    %v353 = vpack.c.b16 %v346, %v345
    %v354 = vpack.c.b16 %v348, %v347
    %v355 = vpack.c.b16 %v350, %v349
    %v356 = vpack.c.b16 %v352, %v351
    %vm361 = vcmask 523264
    %v363 = vsel %vm361, %v251, 0
    %365 = vmatpush.bf16.msra.mxu0 0
    %366 = vmatpush.bf16.msra.mxu0 0
    %367 = vmatpush.bf16.msra.mxu0 0
    %368 = vmatpush.bf16.msra.mxu0 0
    %369 = vmatpush.bf16.msra.mxu0 %v356
    %370 = vmatpush.bf16.msra.mxu0 %v355
    %371 = vmatpush.bf16.msra.mxu0 %v354
    %372 = vmatpush.bf16.msra.mxu0 %v353
    %373 = vmatmul.bf16.gmra.mxu0 %v363
    %v374 = vpop.f32.mrf.mxu0
    %v375 = vadd.f32 %v334, %v374
    %v376 = vpop.f32.mrf.mxu0
    %377 = vdwg.mxu0
    %v378 = vld [vmem:[%s6] sm:$0x1]
    %v380 = vperm.slane %v378, 0
    %v382 = vadd.f32 %v375, %v380
    %v383 = vpack.c.bf16 %v382, %v382
    %v384 = vunpack.c.l.bf16 %v383
    %v385 = vtanh.pop %v384
    %v386 = vpack.c.bf16 %v385, %v385
    %v387 = vld [vmem:[#allocation2] sm:$0xf]
    %v388 = vld [vmem:[#allocation2 + $0x4] sm:$0xf]
    %v389 = vld [vmem:[#allocation2 + $0x8] sm:$0xf]
    %v390 = vld [vmem:[#allocation2 + $0xc] sm:$0xf]
    %v391 = vld [vmem:[#allocation2 + $0x10] sm:$0xf]
    %v392 = vld [vmem:[#allocation2 + $0x14] sm:$0xf]
    %v393 = vld [vmem:[#allocation2 + $0x18] sm:$0xf]
    %v394 = vld [vmem:[#allocation2 + $0x1c] sm:$0xf]
    %v395 = vld [vmem:[#allocation2 + $0x20] sm:$0xf]
    %v396 = vld [vmem:[#allocation2 + $0x24] sm:$0xf]
    %v397 = vld [vmem:[#allocation2 + $0x28] sm:$0xf]
    %v398 = vld [vmem:[#allocation2 + $0x2c] sm:$0xf]
    %v399 = vld [vmem:[#allocation2 + $0x30] sm:$0xf]
    %v400 = vld [vmem:[#allocation2 + $0x34] sm:$0xf]
    %v401 = vld [vmem:[#allocation2 + $0x38] sm:$0xf]
    %v402 = vld [vmem:[#allocation2 + $0x3c] sm:$0xf]
    %v403 = vld [vmem:[%s8] sm:$0x1]
    %v405 = vperm.slane %v403, 0
    %v423 = vunpack.c.l.b16 %v387
    %v424 = vunpack.c.l.b16 %v388
    %v425 = vunpack.c.l.b16 %v389
    %v426 = vunpack.c.l.b16 %v390
    %v427 = vunpack.c.l.b16 %v391
    %v428 = vunpack.c.l.b16 %v392
    %v429 = vunpack.c.l.b16 %v393
    %v430 = vunpack.c.l.b16 %v394
    %v431 = vunpack.c.l.b16 %v395
    %v432 = vunpack.c.l.b16 %v396
    %v433 = vunpack.c.l.b16 %v397
    %v434 = vunpack.c.l.b16 %v398
    %v435 = vunpack.c.l.b16 %v399
    %v436 = vunpack.c.l.b16 %v400
    %v437 = vunpack.c.l.b16 %v401
    %v438 = vunpack.c.l.b16 %v402
    %v439 = vpack.c.b16 %v424, %v423
    %v440 = vpack.c.b16 %v426, %v425
    %v441 = vpack.c.b16 %v428, %v427
    %v442 = vpack.c.b16 %v430, %v429
    %v443 = vpack.c.b16 %v432, %v431
    %v444 = vpack.c.b16 %v434, %v433
    %v445 = vpack.c.b16 %v436, %v435
    %v446 = vpack.c.b16 %v438, %v437
    %455 = vmatpush.bf16.msra.mxu0 %v446
    %456 = vmatpush.bf16.msra.mxu0 %v445
    %457 = vmatpush.bf16.msra.mxu0 %v444
    %458 = vmatpush.bf16.msra.mxu0 %v443
    %459 = vmatpush.bf16.msra.mxu0 %v442
    %460 = vmatpush.bf16.msra.mxu0 %v441
    %461 = vmatpush.bf16.msra.mxu0 %v440
    %462 = vmatpush.bf16.msra.mxu0 %v439
    %463 = vmatmul.bf16.gmra.mxu0 %v386
    %v464 = vpop.f32.mrf.mxu0
    %v465 = vadd.f32 %v405, %v464
    %v466 = vpop.f32.mrf.mxu0
    %467 = vdwg.mxu0
    %v468 = vpack.c.bf16 %v465, %v465
    %v469 = vunpack.c.l.bf16 %v468
    %v470 = vtanh.pop %v469
    %v471 = vpack.c.bf16 %v470, %v470
    %v472 = vld [vmem:[#allocation5] sm:$0xf]
    %v473 = vld [vmem:[#allocation5 + $0x4] sm:$0xf]
    %v474 = vld [vmem:[#allocation5 + $0x8] sm:$0xf]
    %v475 = vld [vmem:[#allocation5 + $0xc] sm:$0xf]
    %v476 = vld [vmem:[#allocation5 + $0x10] sm:$0xf]
    %v477 = vld [vmem:[#allocation5 + $0x14] sm:$0xf]
    %v478 = vld [vmem:[#allocation5 + $0x18] sm:$0xf]
    %v479 = vld [vmem:[#allocation5 + $0x1c] sm:$0xf]
    %v480 = vld [vmem:[#allocation5 + $0x20] sm:$0xf]
    %v481 = vld [vmem:[#allocation5 + $0x24] sm:$0xf]
    %v482 = vld [vmem:[#allocation5 + $0x28] sm:$0xf]
    %v483 = vld [vmem:[#allocation5 + $0x2c] sm:$0xf]
    %v484 = vld [vmem:[#allocation5 + $0x30] sm:$0xf]
    %v485 = vld [vmem:[#allocation5 + $0x34] sm:$0xf]
    %v486 = vld [vmem:[#allocation5 + $0x38] sm:$0xf]
    %v487 = vld [vmem:[#allocation5 + $0x3c] sm:$0xf]
    %v488 = vld [vmem:[%s10] sm:$0x1]
    %v490 = vperm.slane %v488, 0
    %v508 = vunpack.c.l.b16 %v472
    %v509 = vunpack.c.l.b16 %v473
    %v510 = vunpack.c.l.b16 %v474
    %v511 = vunpack.c.l.b16 %v475
    %v512 = vunpack.c.l.b16 %v476
    %v513 = vunpack.c.l.b16 %v477
    %v514 = vunpack.c.l.b16 %v478
    %v515 = vunpack.c.l.b16 %v479
    %v516 = vunpack.c.l.b16 %v480
    %v517 = vunpack.c.l.b16 %v481
    %v518 = vunpack.c.l.b16 %v482
    %v519 = vunpack.c.l.b16 %v483
    %v520 = vunpack.c.l.b16 %v484
    %v521 = vunpack.c.l.b16 %v485
    %v522 = vunpack.c.l.b16 %v486
    %v523 = vunpack.c.l.b16 %v487
    %v524 = vpack.c.b16 %v509, %v508
    %v525 = vpack.c.b16 %v511, %v510
    %v526 = vpack.c.b16 %v513, %v512
    %v527 = vpack.c.b16 %v515, %v514
    %v528 = vpack.c.b16 %v517, %v516
    %v529 = vpack.c.b16 %v519, %v518
    %v530 = vpack.c.b16 %v521, %v520
    %v531 = vpack.c.b16 %v523, %v522
    %540 = vmatpush.bf16.msra.mxu0 %v531
    %541 = vmatpush.bf16.msra.mxu0 %v530
    %542 = vmatpush.bf16.msra.mxu0 %v529
    %543 = vmatpush.bf16.msra.mxu0 %v528
    %544 = vmatpush.bf16.msra.mxu0 %v527
    %545 = vmatpush.bf16.msra.mxu0 %v526
    %546 = vmatpush.bf16.msra.mxu0 %v525
    %547 = vmatpush.bf16.msra.mxu0 %v524
    %548 = vmatmul.bf16.gmra.mxu0 %v471
    %v549 = vpop.f32.mrf.mxu0
    %v550 = vadd.f32 %v490, %v549
    %v551 = vpop.f32.mrf.mxu0
    %552 = vdwg.mxu0
    %v553 = vpack.c.bf16 %v550, %v550
    %v554 = vunpack.c.l.bf16 %v553
    %v555 = vtanh.pop %v554
    %v556 = vpack.c.bf16 %v555, %v555
    %v557 = vld [vmem:[%s11] sm:$0xf]
    %v558 = vld [vmem:[%s11 + $0x4] sm:$0xf]
    %v559 = vld [vmem:[%s11 + $0x8] sm:$0xf]
    %v560 = vld [vmem:[%s11 + $0xc] sm:$0xf]
    %v561 = vld [vmem:[%s11 + $0x10] sm:$0xf]
    %v562 = vld [vmem:[%s11 + $0x14] sm:$0xf]
    %v563 = vld [vmem:[%s11 + $0x18] sm:$0xf]
    %v564 = vld [vmem:[%s11 + $0x1c] sm:$0xf]
    %v565 = vld [vmem:[%s11 + $0x20] sm:$0xf]
    %v566 = vld [vmem:[%s11 + $0x24] sm:$0xf]
    %v567 = vld [vmem:[%s11 + $0x28] sm:$0xf]
    %v568 = vld [vmem:[%s11 + $0x2c] sm:$0xf]
    %v569 = vld [vmem:[%s11 + $0x30] sm:$0xf]
    %v570 = vld [vmem:[%s11 + $0x34] sm:$0xf]
    %v571 = vld [vmem:[%s11 + $0x38] sm:$0xf]
    %v572 = vld [vmem:[%s11 + $0x3c] sm:$0xf]
    %v573 = vld [vmem:[%s12] sm:$0x1]
    %v575 = vperm.slane %v573, 0
    %v593 = vunpack.c.l.b16 %v557
    %v594 = vunpack.c.l.b16 %v558
    %v595 = vunpack.c.l.b16 %v559
    %v596 = vunpack.c.l.b16 %v560
    %v597 = vunpack.c.l.b16 %v561
    %v598 = vunpack.c.l.b16 %v562
    %v599 = vunpack.c.l.b16 %v563
    %v600 = vunpack.c.l.b16 %v564
    %v601 = vunpack.c.l.b16 %v565
    %v602 = vunpack.c.l.b16 %v566
    %v603 = vunpack.c.l.b16 %v567
    %v604 = vunpack.c.l.b16 %v568
    %v605 = vunpack.c.l.b16 %v569
    %v606 = vunpack.c.l.b16 %v570
    %v607 = vunpack.c.l.b16 %v571
    %v608 = vunpack.c.l.b16 %v572
    %v609 = vpack.c.b16 %v594, %v593
    %v610 = vpack.c.b16 %v596, %v595
    %v611 = vpack.c.b16 %v598, %v597
    %v612 = vpack.c.b16 %v600, %v599
    %v613 = vpack.c.b16 %v602, %v601
    %v614 = vpack.c.b16 %v604, %v603
    %v615 = vpack.c.b16 %v606, %v605
    %v616 = vpack.c.b16 %v608, %v607
    %625 = vmatpush.bf16.msra.mxu0 %v616
    %626 = vmatpush.bf16.msra.mxu0 %v615
    %627 = vmatpush.bf16.msra.mxu0 %v614
    %628 = vmatpush.bf16.msra.mxu0 %v613
    %629 = vmatpush.bf16.msra.mxu0 %v612
    %630 = vmatpush.bf16.msra.mxu0 %v611
    %631 = vmatpush.bf16.msra.mxu0 %v610
    %632 = vmatpush.bf16.msra.mxu0 %v609
    %633 = vmatmul.bf16.gmra.mxu0 %v556
    %v634 = vpop.f32.mrf.mxu0
    %v635 = vadd.f32 %v575, %v634
    %v636 = vpop.f32.mrf.mxu0
    %637 = vdwg.mxu0
    %638 = vst.msk [vmem:[#allocation7] sm:$0xff] %vm361, %v635
    // Predicated region
    $region62: #{tpu_custom_call.1} parent=1 // pred_check
      _
    $region63: #{tpu_custom_call.1} parent=1 // pred_check_branch
      %640 = sbr.rel (0) target = $region65
    $region64: #{tpu_custom_call.1} parent=1 // pred_region
      %642 = vsyncadd [#allocation4], 0
      %s644 = sshll.u32 [#allocation7], 4
      %s645 = int_to_ptr.vmem [resolvable:$true] %s644
      %s646 = sshll.u32 %s13, 4
      %s647 = int_to_ptr.hbm [resolvable:$true] %s646
      %649 = dma.vmem_to_hbm [thread:$0]  %s645, 128, %s647, [#allocation4]
    $region65: #{tpu_custom_call.1} parent=1 // pred_fallthru
      _
    // Predicated region
    $region66: #{tpu_custom_call.1} parent=1 // pred_check
      _
    $region67: #{tpu_custom_call.1} parent=1 // pred_check_branch
      %651 = sbr.rel (0) target = $region69
    $region68: #{tpu_custom_call.1} parent=1 // pred_region
      %653 = dma.done [#allocation4], 128
    $region69: #{tpu_custom_call.1} parent=1 // pred_fallthru
      _
    %654 = vsyncpa [#allocation3], 1
    %655 = vsyncpa [#allocation6], 1
    %656 = vsyncpa [#allocation4], 1

</llo_original>
